<compile_context>
chip_gen: v6e
topology: v6e:2x2x1
jax: 0.10.0
libtpu: 0.0.40
codegen_flags: <defaults>
</compile_context>

<pallas_src>
import jax
import jax.numpy as jnp
from jax.experimental import pallas as pl
from jax.experimental.pallas import tpu as pltpu


def _linear_kernel(x_ref, w_ref, b_ref, o_ref):
    # x_ref: (TB, D) VMEM | w_ref: (D, 1) VMEM | b_ref: (1,) SMEM | o_ref: (TB, 1) VMEM
    acc = jnp.dot(x_ref[...], w_ref[...], preferred_element_type=jnp.float32)
    o_ref[...] = (acc + b_ref[0]).astype(o_ref.dtype)


def _pick_batch_tile(B, D):
    """Largest batch tile (multiple of 8, <= 4096) whose double-buffered
    f32 x tile stays under ~8 MiB."""
    max_elems = (8 * 1024 * 1024) // 4 // 2          # f32 elems per single x buffer
    tb = (max_elems // max(D, 1)) // 8 * 8
    tb = max(8, min(4096, tb))
    b_pad8 = ((B + 7) // 8) * 8
    return min(tb, b_pad8)


def linear_regression_forward(x, weight, bias):
    """x: (B, D); weight: (1, D) (PyTorch nn.Linear layout); bias: (1,) -> (B, 1)."""
    B, D = x.shape
    tb = _pick_batch_tile(B, D)

    # Pad ragged batches; padded rows are sliced off the output.
    B_pad = pl.cdiv(B, tb) * tb
    if B_pad != B:
        x = jnp.pad(x, ((0, B_pad - B), (0, 0)))

    w_t = weight.T.astype(x.dtype)                   # (D, 1), resident in VMEM
    b1 = bias.reshape(1).astype(jnp.float32)         # scalar bias in SMEM

    # TODO(synk): for very large D (double-buffered D*TB tile overflowing VMEM)
    # add a second "arbitrary" grid axis over D with a VMEM accumulator (P3).
    out = pl.pallas_call(
        _linear_kernel,
        out_shape=jax.ShapeDtypeStruct((B_pad, 1), x.dtype),
        grid_spec=pltpu.PrefetchScalarGridSpec(
            num_scalar_prefetch=0,
            grid=(B_pad // tb,),
            in_specs=[
                pl.BlockSpec((tb, D), lambda i: (i, 0)),                  # x tile (streamed)
                pl.BlockSpec((D, 1), lambda i: (0, 0)),                   # weight (resident)
                pl.BlockSpec(memory_space=pltpu.MemorySpace.SMEM),        # bias scalar
            ],
            out_specs=pl.BlockSpec((tb, 1), lambda i: (i, 0)),
        ),
        compiler_params=pltpu.CompilerParams(
            dimension_semantics=("parallel",),
            vmem_limit_bytes=32 * 1024 * 1024,
        ),
        cost_estimate=pl.CostEstimate(
            flops=2 * B_pad * D,
            transcendentals=0,
            bytes_accessed=4 * (B_pad * D + B_pad + D + 1),
        ),
    )(x, w_t, b1)

    return out[:B]


if __name__ == "__main__":
    key = jax.random.PRNGKey(0)
    kx, kw, kb, kx2 = jax.random.split(key, 4)

    batch = 8
    input_dim = 16

    # Example inputs (assumed already standardized, like X_train after StandardScaler).
    x = jax.random.normal(kx, (batch, input_dim), dtype=jnp.float32)

    # Deterministic parameter init mimicking nn.Linear's uniform(-1/sqrt(D), 1/sqrt(D)).
    bound = 1.0 / jnp.sqrt(jnp.float32(input_dim))
    weight = jax.random.uniform(kw, (1, input_dim), dtype=jnp.float32,
                                minval=-bound, maxval=bound)
    bias = jax.random.uniform(kb, (1,), dtype=jnp.float32,
                              minval=-bound, maxval=bound)

    y = jax.block_until_ready(linear_regression_forward(x, weight, bias))
    y_ref = x @ weight.T + bias
    assert y.shape == (batch, 1)
    assert jnp.allclose(y, y_ref, atol=1e-5, rtol=1e-5)

    # Ragged batch (exercises the padding + slice path).
    x2 = jax.random.normal(kx2, (37, input_dim), dtype=jnp.float32)
    y2 = jax.block_until_ready(linear_regression_forward(x2, weight, bias))
    y2_ref = x2 @ weight.T + bias
    assert y2.shape == (37, 1)
    assert jnp.allclose(y2, y2_ref, atol=1e-5, rtol=1e-5)

    print("KERNEL_OK")
</pallas_src>

<mosaic_0001>
module attributes {stable_mosaic.version = 11 : i64} {
  func.func @_linear_kernel(%arg0: i32, %arg1: memref<8x16xf32, #tpu.memory_space<vmem>>, %arg2: memref<16x1xf32, #tpu.memory_space<vmem>>, %arg3: memref<1xf32, #tpu.memory_space<smem>>, %arg4: memref<8x1xf32, #tpu.memory_space<vmem>>) attributes {dimension_semantics = [#tpu.dimension_semantics<parallel>], iteration_bounds = array<i64: 1>, scalar_prefetch = 0 : i64, scratch_operands = 0 : i64, tpu.core_type = #tpu.core_type<tc>, window_params = [{transform_indices = @transform_0, window_bounds = array<i64: 8, 16>}, {pipeline_mode = #tpu.pipeline_mode<synchronous>, transform_indices = @transform_1, window_bounds = array<i64: 16, 1>}, {transform_indices = @transform_2, window_bounds = array<i64: 1>}, {transform_indices = @transform_3, window_bounds = array<i64: 8, 1>}]} {
    %c0 = arith.constant 0 : index
    %c0_0 = arith.constant 0 : index
    %0 = vector.load %arg1[%c0, %c0_0] : memref<8x16xf32, #tpu.memory_space<vmem>>, vector<8x16xf32>
    %c0_1 = arith.constant 0 : index
    %c0_2 = arith.constant 0 : index
    %1 = vector.load %arg2[%c0_1, %c0_2] : memref<16x1xf32, #tpu.memory_space<vmem>>, vector<16x1xf32>
    %cst = arith.constant dense<0.000000e+00> : vector<8x1xf32>
    %2 = tpu.matmul %0, %1, %cst {dimension_numbers = #tpu.dot_dimension_numbers<[1], [0], [0], [1], [0, 0, 1, 1], [], []>} : vector<8x16xf32>, vector<16x1xf32>, vector<8x1xf32> -> vector<8x1xf32>
    %c0_3 = arith.constant 0 : index
    %3 = memref.load %arg3[%c0_3] : memref<1xf32, #tpu.memory_space<smem>>
    %4 = vector.broadcast %3 : f32 to vector<8x1xf32>
    %5 = arith.addf %2, %4 : vector<8x1xf32>
    %c0_4 = arith.constant 0 : index
    %c0_5 = arith.constant 0 : index
    %6 = vector.load %arg4[%c0_4, %c0_5] : memref<8x1xf32, #tpu.memory_space<vmem>>, vector<8x1xf32>
    tpu.vector_store %arg4[%c0_4, %c0_5], %5 {strides = array<i32>} : memref<8x1xf32, #tpu.memory_space<vmem>>, vector<8x1xf32>,
    return
  }
  func.func @transform_0(%arg0: i32) -> (i32, i32) {
    %c0_i32 = arith.constant 0 : i32
    %c0_i32_0 = arith.constant 0 : i32
    return %arg0, %c0_i32 : i32, i32
  }
  func.func @transform_1(%arg0: i32) -> (i32, i32) {
    %c0_i32 = arith.constant 0 : i32
    %c0_i32_0 = arith.constant 0 : i32
    %c0_i32_1 = arith.constant 0 : i32
    return %c0_i32, %c0_i32_0 : i32, i32
  }
  func.func @transform_2(%arg0: i32) -> i32 {
    %c0_i32 = arith.constant 0 : i32
    %c0_i32_0 = arith.constant 0 : i32
    return %c0_i32 : i32
  }
  func.func @transform_3(%arg0: i32) -> (i32, i32) {
    %c0_i32 = arith.constant 0 : i32
    %c0_i32_0 = arith.constant 0 : i32
    return %arg0, %c0_i32 : i32, i32
  }
}

</mosaic_0001>

<llo_original>
// kernel: tpu_custom_call.1
$region0: #{tpu_custom_call.1}
  #allocation0 [shape = 'u32[]', space=smem, size = 0x4, offset = 0x4, fixed_abs, tag = 'smem constant byte address 0x4 - core index']
  #allocation1 [shape = 'u32[144,128]{1,0:T(1,128)}', space=vmem, size = 0x12000, scoped, tag = 'internal scratch']
  #allocation2 [shape = 'f32[1]{0:T(128)S(6)}', space=smem, size = 0x200, scoped, tag = 'scoped memory for tpu_custom_call.1']
  %s0 = inlined_call_operand.vmem [shape: f32[8,16], index: 0, kind: input, shape index: {}]
  %s1 = inlined_call_operand.vmem [shape: f32[16,1], index: 1, kind: input, shape index: {}]
  %s2 = inlined_call_operand.<no memory space> [shape: f32[1], index: 2, kind: input, shape index: {}]
  %s3 = inlined_call_operand.vmem [shape: f32[8,1], index: 3, kind: output, shape index: {}]
  %s4 = sld [smem:[#allocation0]]
  $region22: #{tpu_custom_call.1} parent=0
    _
  %s6 = ssub.s32 1, %s4
  %s7 = scalar_select 0, %s6, %s4
  %8 = sst [smem:[#allocation2]] %s2
  // Predicated region
  $region2: #{tpu_custom_call.1} parent=0 // pred_check
    _
  $region3: #{tpu_custom_call.1} parent=0 // pred_check_branch
    %10 = sbr.rel (0) target = $region5
  $region4: #{tpu_custom_call.1} parent=0 // pred_region
    _
  $region5: #{tpu_custom_call.1} parent=0 // pred_fallthru
    _
  // Predicated region
  $region6: #{tpu_custom_call.1} parent=0 // pred_check
    _
  $region7: #{tpu_custom_call.1} parent=0 // pred_check_branch
    %12 = sbr.rel (0) target = $region9
  $region8: #{tpu_custom_call.1} parent=0 // pred_region
    _
  $region9: #{tpu_custom_call.1} parent=0 // pred_fallthru
    _
  // Predicated region
  $region10: #{tpu_custom_call.1} parent=0 // pred_check
    _
  $region11: #{tpu_custom_call.1} parent=0 // pred_check_branch
    %14 = sbr.rel (0) target = $region13
  $region12: #{tpu_custom_call.1} parent=0 // pred_region
    _
  $region13: #{tpu_custom_call.1} parent=0 // pred_fallthru
    _
  %v15 = vld [vmem:[%s0] sm:$0xff]
  %v16 = vld [vmem:[%s1] sm:$0xff]
  %v17 = vld [vmem:[%s1 + $0x8] sm:$0xff]
  %s18 = sld [smem:[#allocation2]]
  %v19 = vstv %s18
  %vm20 = vcmask 130048
  %v22 = vsel %vm20, %v15, 0
  %24 = vmatprep.subr.mxu0 0.0
  %25 = vmatpush1.msra.mxu0 0.0
  %26 = vmatprep.subr.mxu0 0.0
  %27 = vmatpush1.msra.mxu0 0.0
  %28 = vmatprep.subr.mxu0 0.0
  %29 = vmatpush1.msra.mxu0 0.0
  %30 = vmatprep.subr.mxu0 0.0
  %31 = vmatpush1.msra.mxu0 0.0
  %32 = vmatprep.subr.mxu0 0.0
  %33 = vmatpush1.msra.mxu0 0.0
  %34 = vmatprep.subr.mxu0 0.0
  %35 = vmatpush1.msra.mxu0 0.0
  %36 = vmatprep.subr.mxu0 0.0
  %37 = vmatpush1.msra.mxu0 0.0
  %38 = vmatprep.subr.mxu0 0.0
  %39 = vmatpush1.msra.mxu0 0.0
  %40 = vmatprep.subr.mxu0 0.0
  %41 = vmatpush1.msra.mxu0 0.0
  %42 = vmatprep.subr.mxu0 0.0
  %43 = vmatpush1.msra.mxu0 0.0
  %44 = vmatprep.subr.mxu0 0.0
  %45 = vmatpush1.msra.mxu0 0.0
  %46 = vmatprep.subr.mxu0 0.0
  %47 = vmatpush1.msra.mxu0 0.0
  %48 = vmatprep.subr.mxu0 0.0
  %49 = vmatpush1.msra.mxu0 0.0
  %50 = vmatprep.subr.mxu0 0.0
  %51 = vmatpush1.msra.mxu0 0.0
  %52 = vmatprep.subr.mxu0 0.0
  %53 = vmatpush1.msra.mxu0 %v17
  %54 = vmatprep.subr.mxu0 0.0
  %55 = vmatpush1.msra.mxu0 %v16
  %56 = vmatprep.subr.mxu0 0.0
  %57 = vmatpush2.msra.mxu0 0.0
  %58 = vmatprep.subr.mxu0 0.0
  %59 = vmatpush2.msra.mxu0 0.0
  %60 = vmatprep.subr.mxu0 0.0
  %61 = vmatpush2.msra.mxu0 0.0
  %62 = vmatprep.subr.mxu0 0.0
  %63 = vmatpush2.msra.mxu0 0.0
  %64 = vmatprep.subr.mxu0 0.0
  %65 = vmatpush2.msra.mxu0 0.0
  %66 = vmatprep.subr.mxu0 0.0
  %67 = vmatpush2.msra.mxu0 0.0
  %68 = vmatprep.subr.mxu0 0.0
  %69 = vmatpush2.msra.mxu0 0.0
  %70 = vmatprep.subr.mxu0 0.0
  %71 = vmatpush2.msra.mxu0 0.0
  %72 = vmatprep.subr.mxu0 0.0
  %73 = vmatpush2.msra.mxu0 0.0
  %74 = vmatprep.subr.mxu0 0.0
  %75 = vmatpush2.msra.mxu0 0.0
  %76 = vmatprep.subr.mxu0 0.0
  %77 = vmatpush2.msra.mxu0 0.0
  %78 = vmatprep.subr.mxu0 0.0
  %79 = vmatpush2.msra.mxu0 0.0
  %80 = vmatprep.subr.mxu0 0.0
  %81 = vmatpush2.msra.mxu0 0.0
  %82 = vmatprep.subr.mxu0 0.0
  %83 = vmatpush2.msra.mxu0 0.0
  %84 = vmatprep.subr.mxu0 0.0
  %85 = vmatpush2.msra.mxu0 0.0
  %86 = vmatprep.subr.mxu0 0.0
  %87 = vmatpush2.msra.mxu0 0.0
  %88 = vmatprep.mubr.f32.mxu0 0.0
  %89 = vmatmul.mubr.f32.gmra.mxu0 %v22
  %v90 = vpop.f32.mrf.mxu0
  %v91 = vadd.f32 %v19, %v90
  %v92 = vpop.f32.mrf.mxu0
  %93 = vdwg.mxu0
  %vm94 = vcmask 7168
  %95 = vst.msk [vmem:[%s3] sm:$0xff] %vm94, %v91
  // Predicated region
  $region14: #{tpu_custom_call.1} parent=0 // pred_check
    _
  $region15: #{tpu_custom_call.1} parent=0 // pred_check_branch
    %97 = sbr.rel (0) target = $region17
  $region16: #{tpu_custom_call.1} parent=0 // pred_region
    _
  $region17: #{tpu_custom_call.1} parent=0 // pred_fallthru
    _
  // Predicated region
  $region18: #{tpu_custom_call.1} parent=0 // pred_check
    _
  $region19: #{tpu_custom_call.1} parent=0 // pred_check_branch
    %99 = sbr.rel (0) target = $region21
  $region20: #{tpu_custom_call.1} parent=0 // pred_region
    _
  $region21: #{tpu_custom_call.1} parent=0 // pred_fallthru
    _

</llo_original>
